<compile_context>
chip_gen: v5e
topology: v5e:2x2
jax: 0.10.0
libtpu: 0.0.40
codegen_flags: <defaults>
</compile_context>

<pallas_src>
import warnings

import numpy as np
import jax
import jax.numpy as jnp
from jax import lax
from jax.experimental import pallas as pl
from jax.experimental.pallas import tpu as pltpu

# donation is a no-op on some emulated backends; keep stderr clean there
warnings.filterwarnings("ignore", message="Some donated buffers were not usable")


# ----------------------- synthetic CP constants ------------------------------
class CP:
    t_all = 600.0            # total sim time for battery model
    k_th = 0.021             # throttle -> thrust slope
    b_th = 0.0021            # throttle -> thrust offset
    k_t = 0.01               # thrust -> (kRPM)^2 coefficient
    sigma = 0.01             # dirty-derivative filter constant
    roll_rate_kp, roll_rate_ki, roll_rate_kd = 0.08, 0.03, 0.0008
    pitch_rate_kp, pitch_rate_ki, pitch_rate_kd = 0.08, 0.03, 0.0008
    yaw_rate_kp, yaw_rate_ki, yaw_rate_kd = 0.15, 0.05, 0.0

    _l, _c = 0.08, 0.013     # arm length / torque coefficient (mixing matrix)
    G_1 = np.array(
        [[1.0, 1.0, 1.0, 1.0],
         [-_l, _l, _l, -_l],
         [_l, -_l, _l, -_l],
         [_c, _c, -_c, -_c]], dtype=np.float64)
    G_1_inv = np.linalg.inv(G_1)


# ----------------------------- Pallas kernel ---------------------------------
def _make_kernel(T, ts, a1, a2, kp, ki, kd, awu, u_limit, g1inv, inv_sqrt_kt):
    """All closure constants are Python scalars (no captured array constants)."""
    kp = tuple(float(v) for v in kp)
    ki = tuple(float(v) for v in ki)
    kd = tuple(float(v) for v in kd)
    awu = tuple(float(v) for v in awu)
    g = [[float(v) for v in row] for row in np.asarray(g1inv, np.float64)]
    ts = float(ts)
    a1 = float(a1)
    a2 = float(a2)
    u_limit = float(u_limit)
    inv_sqrt_kt = float(inv_sqrt_kt)

    def kernel(cmd_ref, pqr_ref, state_ref, delta_ref, state_out_ref):
        # --- inputs (lane axis = agents, tile width T) ------------------------
        rate_cmd = cmd_ref[0:3, :]                        # [3, T] p/q/r rate cmd
        thrust = jnp.maximum(cmd_ref[3:4, :], 0.0)        # [1, T] (voltage folded)
        pqr = pqr_ref[...]                                # [3, T] measured rates

        # lane-packed PID state: [integ | err_d1 | errdot_d1], each T lanes wide
        integ_d1 = state_ref[:, 0:T]
        err_d1 = state_ref[:, T:2 * T]
        errdot_d1 = state_ref[:, 2 * T:3 * T]

        # per-channel gain vectors from scalar literals (iota + select, VPU only)
        rid3 = lax.broadcasted_iota(jnp.int32, (3, T), 0)

        def row3(v):
            return jnp.where(rid3 == 0, v[0],
                             jnp.where(rid3 == 1, v[1], v[2]))

        # --- PID (trapezoid integrator + dirty derivative + anti-windup) ------
        error = rate_cmd - pqr
        integ = integ_d1 + (ts * 0.5) * (error + err_d1)
        error_dot = a1 * errdot_d1 + a2 * (error - err_d1)
        u = row3(kp) * error + row3(ki) * integ + row3(kd) * error_dot
        u_sat = jnp.clip(u, -u_limit, u_limit)
        integ = integ + row3(awu) * (u_sat - u)           # Ts/ki anti-windup

        # persist PID state: three lane-aligned stores, no sublane concatenate
        state_out_ref[:, 0:T] = integ
        state_out_ref[:, T:2 * T] = error
        state_out_ref[:, 2 * T:3 * T] = error_dot

        # --- mixer: G_1_inv @ [T; Mx; My; Mz] as broadcast FMAs over [4, T] ----
        Mx = u_sat[0:1, :]
        My = u_sat[1:2, :]
        Mz = u_sat[2:3, :]
        rid4 = lax.broadcasted_iota(jnp.int32, (4, T), 0)

        def row4(c):
            return jnp.where(rid4 == 0, c[0],
                             jnp.where(rid4 == 1, c[1],
                                       jnp.where(rid4 == 2, c[2], c[3])))

        tpm = (row4([g[0][0], g[1][0], g[2][0], g[3][0]]) * thrust
               + row4([g[0][1], g[1][1], g[2][1], g[3][1]]) * Mx
               + row4([g[0][2], g[1][2], g[2][2], g[3][2]]) * My
               + row4([g[0][3], g[1][3], g[2][3], g[3][3]]) * Mz)
        tpm = jnp.maximum(tpm, 0.0)
        delta_ref[...] = (jnp.sqrt(tpm) * inv_sqrt_kt).astype(delta_ref.dtype)

    return kernel


# ------------------------------ JAX wrapper ----------------------------------
class AtpRatePallas:
    LANE = 128
    MAX_BLOCK = 32768     # agents per grid block (fits default scoped VMEM on v5e+)

    def __init__(self, num_agent: int, ts_control: float, has_battery: bool,
                 dtype=jnp.float32):
        self.num_agent = num_agent
        self.ts = float(ts_control)
        self.has_battery = has_battery
        self.dtype = dtype

        # pad agent axis to lane-dense width; tile it if very large
        n_pad = max(self.LANE, -(-num_agent // self.LANE) * self.LANE)
        if n_pad <= self.MAX_BLOCK:
            Np, T = n_pad, n_pad
        else:
            Np = -(-num_agent // self.MAX_BLOCK) * self.MAX_BLOCK
            T = self.MAX_BLOCK
        self.Np, self.T = Np, T
        grid = (Np // T,)

        ts_factor = ts_control / 0.02
        kp = (CP.roll_rate_kp, CP.pitch_rate_kp, CP.yaw_rate_kp)
        ki = tuple(g / ts_factor for g in
                   (CP.roll_rate_ki, CP.pitch_rate_ki, CP.yaw_rate_ki))
        kd = tuple(g * ts_factor for g in
                   (CP.roll_rate_kd, CP.pitch_rate_kd, CP.yaw_rate_kd))
        awu = tuple(ts_control / g if g != 0.0 else 0.0 for g in ki)
        sigma = CP.sigma
        a1 = (2.0 * sigma - ts_control) / (2.0 * sigma + ts_control)
        a2 = 2.0 / (2.0 * sigma + ts_control)
        inv_sqrt_kt = 1.0 / float(np.sqrt(CP.k_t))

        kernel = _make_kernel(T, ts_control, a1, a2, kp, ki, kd, awu,
                              999.0, CP.G_1_inv, inv_sqrt_kt)

        call = pl.pallas_call(
            kernel,
            grid=grid,
            in_specs=[
                pl.BlockSpec((4, T), lambda i: (0, i)),        # cmd (thrust folded)
                pl.BlockSpec((3, T), lambda i: (0, i)),        # body rates p, q, r
                pl.BlockSpec((3, 3 * T), lambda i: (0, i)),    # packed PID state
            ],
            out_specs=(
                pl.BlockSpec((4, T), lambda i: (0, i)),        # delta (kRPM)
                pl.BlockSpec((3, 3 * T), lambda i: (0, i)),    # new PID state
            ),
            out_shape=(
                jax.ShapeDtypeStruct((4, Np), dtype),
                jax.ShapeDtypeStruct((3, 3 * Np), dtype),
            ),
            input_output_aliases={2: 1},                        # state in-place
            compiler_params=pltpu.CompilerParams(
                dimension_semantics=("parallel",),
                vmem_limit_bytes=32 * 1024 * 1024,
            ),
        )

        N = num_agent
        kth4 = 4.0 * CP.k_th
        bth4 = 4.0 * CP.b_th

        # jit'ed functional step: layout transforms fuse with the kernel launch.
        # (If the surrounding sim keeps [C, Np] layout natively, these transposes
        #  and pads disappear entirely.)
        def step(ego_states, cmd, state, voltage_cf):
            cmd2 = jnp.transpose(cmd[:, :, 0]).astype(dtype)              # [4, N]
            pqr2 = jnp.transpose(ego_states[:, 19:22, 0]).astype(dtype)   # [3, N]
            thrust_row = (cmd2[3:4, :] * kth4 + bth4) * voltage_cf        # battery
            cmd2 = jnp.concatenate([cmd2[0:3, :], thrust_row], axis=0)
            if Np != N:
                cmd2 = jnp.pad(cmd2, ((0, 0), (0, Np - N)))
                pqr2 = jnp.pad(pqr2, ((0, 0), (0, Np - N)))
            delta, new_state = call(cmd2, pqr2, state)
            return jnp.transpose(delta[:, :N])[:, :, None], new_state     # [N,4,1]

        self._step = jax.jit(step, donate_argnums=(2,))

        # lane-packed (block-interleaved) PID state, zero-initialized
        self.state = jnp.zeros((3, 3 * Np), dtype)

    def reset(self):
        self.state = jnp.zeros((3, 3 * self.Np), self.dtype)

    def forward(self, ego_states, cmd, all_sim_t: float):
        if self.has_battery:
            voltage = 4.2 - all_sim_t / CP.t_all * (4.2 - 3.6)
            voltage_cf = voltage / 4.2
        else:
            voltage_cf = 1.0
        delta, self.state = self._step(ego_states, cmd, self.state,
                                       jnp.asarray(voltage_cf, self.dtype))
        return delta


# ------------------------- pure-numpy reference ------------------------------
def _reference_rollout(ego_seq, cmd_seq, t_seq, ts, has_battery, u_limit=999.0):
    """float64 multi-step reference (exercises PID state carry + anti-windup)."""
    ts_factor = ts / 0.02
    kp = np.array([CP.roll_rate_kp, CP.pitch_rate_kp, CP.yaw_rate_kp])[:, None]
    ki = (np.array([CP.roll_rate_ki, CP.pitch_rate_ki, CP.yaw_rate_ki]) / ts_factor)[:, None]
    kd = (np.array([CP.roll_rate_kd, CP.pitch_rate_kd, CP.yaw_rate_kd]) * ts_factor)[:, None]
    awu = np.where(ki != 0.0, ts / np.where(ki != 0.0, ki, 1.0), 0.0)
    a1 = (2.0 * CP.sigma - ts) / (2.0 * CP.sigma + ts)
    a2 = 2.0 / (2.0 * CP.sigma + ts)

    N = np.asarray(cmd_seq[0]).shape[0]
    integ = np.zeros((3, N))
    err_d1 = np.zeros((3, N))
    errdot_d1 = np.zeros((3, N))
    outs = []
    for ego, cmd, t in zip(ego_seq, cmd_seq, t_seq):
        ego = np.asarray(ego, np.float64)
        cmd = np.asarray(cmd, np.float64)
        cmd2 = cmd[:, :, 0].T                  # [4, N]
        pqr = ego[:, 19:22, 0].T               # [3, N]
        vcf = (4.2 - t / CP.t_all * (4.2 - 3.6)) / 4.2 if has_battery else 1.0

        thrust = np.maximum(4.0 * (cmd2[3:4] * CP.k_th + CP.b_th) * vcf, 0.0)
        error = cmd2[0:3] - pqr
        integ = integ + ts / 2.0 * (error + err_d1)
        error_dot = a1 * errdot_d1 + a2 * (error - err_d1)
        u = kp * error + ki * integ + kd * error_dot
        u_sat = np.clip(u, -u_limit, u_limit)
        integ = integ + awu * (u_sat - u)
        err_d1, errdot_d1 = error, error_dot

        wrench = np.concatenate([thrust, u_sat], axis=0)
        tpm = np.maximum(CP.G_1_inv @ wrench, 0.0)
        outs.append(np.sqrt(tpm / CP.k_t).T[:, :, None])   # [N, 4, 1]
    return outs


if __name__ == "__main__":
    num_agent = 8
    n_steps = 3
    ts = 0.02

    key = jax.random.PRNGKey(0)
    ego_seq, cmd_seq, t_seq = [], [], []
    for s in range(n_steps):
        key, k1, k2, k3 = jax.random.split(key, 4)
        ego_seq.append(jax.random.normal(k1, (num_agent, 30, 1), jnp.float32) * 0.3)
        rate = jax.random.normal(k2, (num_agent, 3, 1), jnp.float32) * 0.2
        thr = jax.random.uniform(k3, (num_agent, 1, 1), jnp.float32)
        cmd_seq.append(jnp.concatenate([rate, thr], axis=1))      # [N, 4, 1]
        t_seq.append(10.0 + s * ts)

    model = AtpRatePallas(num_agent=num_agent, ts_control=ts, has_battery=True)

    outs = []
    for ego, cmd, t in zip(ego_seq, cmd_seq, t_seq):
        delta = model.forward(ego, cmd, t)
        outs.append(np.asarray(jax.block_until_ready(delta)))

    refs = _reference_rollout([np.asarray(e) for e in ego_seq],
                              [np.asarray(c) for c in cmd_seq],
                              t_seq, ts, has_battery=True)

    for step_idx, (got, ref) in enumerate(zip(outs, refs)):
        assert got.shape == (num_agent, 4, 1)
        # compare in (kRPM)^2 (= thrust/k_t) space: avoids sqrt sensitivity right
        # at the tpm >= 0 clamp when f32 and f64 land on opposite sides of zero
        np.testing.assert_allclose(got ** 2, ref ** 2, rtol=1e-3, atol=1e-3,
                                   err_msg=f"squared mismatch at step {step_idx}")
        np.testing.assert_allclose(got, ref, rtol=2e-3, atol=2e-2,
                                   err_msg=f"mismatch at step {step_idx}")

    print("KERNEL_OK")
</pallas_src>

<mosaic_0001>
module attributes {stable_mosaic.version = 11 : i64} {
  func.func @kernel(%arg0: i32, %arg1: memref<4x128xf32, #tpu.memory_space<vmem>>, %arg2: memref<3x128xf32, #tpu.memory_space<vmem>>, %arg3: memref<3x384xf32, #tpu.memory_space<vmem>>, %arg4: memref<4x128xf32, #tpu.memory_space<vmem>>, %arg5: memref<3x384xf32, #tpu.memory_space<vmem>>) attributes {dimension_semantics = [#tpu.dimension_semantics<parallel>], iteration_bounds = array<i64: 1>, scalar_prefetch = 0 : i64, scratch_operands = 0 : i64, tpu.core_type = #tpu.core_type<tc>, window_params = [{transform_indices = @transform_0, window_bounds = array<i64: 4, 128>}, {transform_indices = @transform_1, window_bounds = array<i64: 3, 128>}, {transform_indices = @transform_2, window_bounds = array<i64: 3, 384>}, {transform_indices = @transform_3, window_bounds = array<i64: 4, 128>}, {transform_indices = @transform_4, window_bounds = array<i64: 3, 384>}]} {
    %c0 = arith.constant 0 : index
    %c0_0 = arith.constant 0 : index
    %0 = vector.load %arg1[%c0, %c0_0] : memref<4x128xf32, #tpu.memory_space<vmem>>, vector<3x128xf32>
    %c3 = arith.constant 3 : index
    %c0_1 = arith.constant 0 : index
    %1 = vector.load %arg1[%c3, %c0_1] : memref<4x128xf32, #tpu.memory_space<vmem>>, vector<1x128xf32>
    %cst = arith.constant 0.000000e+00 : f32
    %2 = vector.broadcast %cst : f32 to vector<1x128xf32>
    %3 = arith.maximumf %1, %2 : vector<1x128xf32>
    %c0_2 = arith.constant 0 : index
    %c0_3 = arith.constant 0 : index
    %4 = vector.load %arg2[%c0_2, %c0_3] : memref<3x128xf32, #tpu.memory_space<vmem>>, vector<3x128xf32>
    %c0_4 = arith.constant 0 : index
    %c0_5 = arith.constant 0 : index
    %5 = vector.load %arg3[%c0_4, %c0_5] : memref<3x384xf32, #tpu.memory_space<vmem>>, vector<3x128xf32>
    %c0_6 = arith.constant 0 : index
    %c128 = arith.constant 128 : index
    %6 = vector.load %arg3[%c0_6, %c128] : memref<3x384xf32, #tpu.memory_space<vmem>>, vector<3x128xf32>
    %c0_7 = arith.constant 0 : index
    %c256 = arith.constant 256 : index
    %7 = vector.load %arg3[%c0_7, %c256] : memref<3x384xf32, #tpu.memory_space<vmem>>, vector<3x128xf32>
    %8 = tpu.iota {dimensions = array<i32: 0>} : vector<3x128xi32>
    %9 = arith.subf %0, %4 : vector<3x128xf32>
    %10 = arith.addf %9, %6 : vector<3x128xf32>
    %cst_8 = arith.constant 0.00999999977 : f32
    %11 = vector.broadcast %cst_8 : f32 to vector<3x128xf32>
    %12 = arith.mulf %11, %10 : vector<3x128xf32>
    %13 = arith.addf %5, %12 : vector<3x128xf32>
    %cst_9 = arith.constant 0.000000e+00 : f32
    %14 = vector.broadcast %cst_9 : f32 to vector<3x128xf32>
    %15 = arith.mulf %14, %7 : vector<3x128xf32>
    %16 = arith.subf %9, %6 : vector<3x128xf32>
    %cst_10 = arith.constant 5.000000e+01 : f32
    %17 = vector.broadcast %cst_10 : f32 to vector<3x128xf32>
    %18 = arith.mulf %17, %16 : vector<3x128xf32>
    %19 = arith.addf %15, %18 : vector<3x128xf32>
    %c0_i32 = arith.constant 0 : i32
    %20 = vector.broadcast %c0_i32 : i32 to vector<3x128xi32>
    %21 = arith.cmpi eq, %8, %20 : vector<3x128xi32>
    %c1_i32 = arith.constant 1 : i32
    %22 = vector.broadcast %c1_i32 : i32 to vector<3x128xi32>
    %23 = arith.cmpi eq, %8, %22 : vector<3x128xi32>
    %cst_11 = arith.constant 8.000000e-02 : f32
    %cst_12 = arith.constant 1.500000e-01 : f32
    %24 = vector.broadcast %cst_11 : f32 to vector<3x128xf32>
    %25 = vector.broadcast %cst_12 : f32 to vector<3x128xf32>
    %26 = arith.select %23, %24, %25 : vector<3x128xi1>, vector<3x128xf32>
    %cst_13 = arith.constant 8.000000e-02 : f32
    %27 = vector.broadcast %cst_13 : f32 to vector<3x128xf32>
    %28 = arith.select %21, %27, %26 : vector<3x128xi1>, vector<3x128xf32>
    %29 = arith.mulf %28, %9 : vector<3x128xf32>
    %c0_i32_14 = arith.constant 0 : i32
    %30 = vector.broadcast %c0_i32_14 : i32 to vector<3x128xi32>
    %31 = arith.cmpi eq, %8, %30 : vector<3x128xi32>
    %c1_i32_15 = arith.constant 1 : i32
    %32 = vector.broadcast %c1_i32_15 : i32 to vector<3x128xi32>
    %33 = arith.cmpi eq, %8, %32 : vector<3x128xi32>
    %cst_16 = arith.constant 3.000000e-02 : f32
    %cst_17 = arith.constant 5.000000e-02 : f32
    %34 = vector.broadcast %cst_16 : f32 to vector<3x128xf32>
    %35 = vector.broadcast %cst_17 : f32 to vector<3x128xf32>
    %36 = arith.select %33, %34, %35 : vector<3x128xi1>, vector<3x128xf32>
    %cst_18 = arith.constant 3.000000e-02 : f32
    %37 = vector.broadcast %cst_18 : f32 to vector<3x128xf32>
    %38 = arith.select %31, %37, %36 : vector<3x128xi1>, vector<3x128xf32>
    %39 = arith.mulf %38, %13 : vector<3x128xf32>
    %40 = arith.addf %29, %39 : vector<3x128xf32>
    %c0_i32_19 = arith.constant 0 : i32
    %41 = vector.broadcast %c0_i32_19 : i32 to vector<3x128xi32>
    %42 = arith.cmpi eq, %8, %41 : vector<3x128xi32>
    %c1_i32_20 = arith.constant 1 : i32
    %43 = vector.broadcast %c1_i32_20 : i32 to vector<3x128xi32>
    %44 = arith.cmpi eq, %8, %43 : vector<3x128xi32>
    %cst_21 = arith.constant 8.000000e-04 : f32
    %cst_22 = arith.constant 0.000000e+00 : f32
    %45 = vector.broadcast %cst_21 : f32 to vector<3x128xf32>
    %46 = vector.broadcast %cst_22 : f32 to vector<3x128xf32>
    %47 = arith.select %44, %45, %46 : vector<3x128xi1>, vector<3x128xf32>
    %cst_23 = arith.constant 8.000000e-04 : f32
    %48 = vector.broadcast %cst_23 : f32 to vector<3x128xf32>
    %49 = arith.select %42, %48, %47 : vector<3x128xi1>, vector<3x128xf32>
    %50 = arith.mulf %49, %19 : vector<3x128xf32>
    %51 = arith.addf %40, %50 : vector<3x128xf32>
    %cst_24 = arith.constant -9.990000e+02 : f32
    %cst_25 = arith.constant 9.990000e+02 : f32
    %52 = vector.broadcast %cst_24 : f32 to vector<3x128xf32>
    %53 = arith.maximumf %52, %51 : vector<3x128xf32>
    %54 = vector.broadcast %cst_25 : f32 to vector<3x128xf32>
    %55 = arith.minimumf %54, %53 : vector<3x128xf32>
    %c0_i32_26 = arith.constant 0 : i32
    %56 = vector.broadcast %c0_i32_26 : i32 to vector<3x128xi32>
    %57 = arith.cmpi eq, %8, %56 : vector<3x128xi32>
    %c1_i32_27 = arith.constant 1 : i32
    %58 = vector.broadcast %c1_i32_27 : i32 to vector<3x128xi32>
    %59 = arith.cmpi eq, %8, %58 : vector<3x128xi32>
    %cst_28 = arith.constant 0.666666686 : f32
    %cst_29 = arith.constant 4.000000e-01 : f32
    %60 = vector.broadcast %cst_28 : f32 to vector<3x128xf32>
    %61 = vector.broadcast %cst_29 : f32 to vector<3x128xf32>
    %62 = arith.select %59, %60, %61 : vector<3x128xi1>, vector<3x128xf32>
    %cst_30 = arith.constant 0.666666686 : f32
    %63 = vector.broadcast %cst_30 : f32 to vector<3x128xf32>
    %64 = arith.select %57, %63, %62 : vector<3x128xi1>, vector<3x128xf32>
    %65 = arith.subf %55, %51 : vector<3x128xf32>
    %66 = arith.mulf %64, %65 : vector<3x128xf32>
    %67 = arith.addf %13, %66 : vector<3x128xf32>
    %c0_31 = arith.constant 0 : index
    %c0_32 = arith.constant 0 : index
    %68 = vector.load %arg5[%c0_31, %c0_32] : memref<3x384xf32, #tpu.memory_space<vmem>>, vector<3x128xf32>
    tpu.vector_store %arg5[%c0_31, %c0_32], %67 {strides = array<i32>} : memref<3x384xf32, #tpu.memory_space<vmem>>, vector<3x128xf32>,
    %c0_33 = arith.constant 0 : index
    %c128_34 = arith.constant 128 : index
    %69 = vector.load %arg5[%c0_33, %c128_34] : memref<3x384xf32, #tpu.memory_space<vmem>>, vector<3x128xf32>
    tpu.vector_store %arg5[%c0_33, %c128_34], %9 {strides = array<i32>} : memref<3x384xf32, #tpu.memory_space<vmem>>, vector<3x128xf32>,
    %c0_35 = arith.constant 0 : index
    %c256_36 = arith.constant 256 : index
    %70 = vector.load %arg5[%c0_35, %c256_36] : memref<3x384xf32, #tpu.memory_space<vmem>>, vector<3x128xf32>
    tpu.vector_store %arg5[%c0_35, %c256_36], %19 {strides = array<i32>} : memref<3x384xf32, #tpu.memory_space<vmem>>, vector<3x128xf32>,
    %71 = vector.extract_strided_slice %55 {offsets = [0, 0], sizes = [1, 128], strides = [1, 1]} : vector<3x128xf32> to vector<1x128xf32>
    %72 = vector.extract_strided_slice %55 {offsets = [1, 0], sizes = [1, 128], strides = [1, 1]} : vector<3x128xf32> to vector<1x128xf32>
    %73 = vector.extract_strided_slice %55 {offsets = [2, 0], sizes = [1, 128], strides = [1, 1]} : vector<3x128xf32> to vector<1x128xf32>
    %74 = tpu.iota {dimensions = array<i32: 0>} : vector<4x128xi32>
    %c0_i32_37 = arith.constant 0 : i32
    %75 = vector.broadcast %c0_i32_37 : i32 to vector<4x128xi32>
    %76 = arith.cmpi eq, %74, %75 : vector<4x128xi32>
    %c1_i32_38 = arith.constant 1 : i32
    %77 = vector.broadcast %c1_i32_38 : i32 to vector<4x128xi32>
    %78 = arith.cmpi eq, %74, %77 : vector<4x128xi32>
    %c2_i32 = arith.constant 2 : i32
    %79 = vector.broadcast %c2_i32 : i32 to vector<4x128xi32>
    %80 = arith.cmpi eq, %74, %79 : vector<4x128xi32>
    %cst_39 = arith.constant 2.500000e-01 : f32
    %cst_40 = arith.constant 2.500000e-01 : f32
    %81 = vector.broadcast %cst_39 : f32 to vector<4x128xf32>
    %82 = vector.broadcast %cst_40 : f32 to vector<4x128xf32>
    %83 = arith.select %80, %81, %82 : vector<4x128xi1>, vector<4x128xf32>
    %cst_41 = arith.constant 2.500000e-01 : f32
    %84 = vector.broadcast %cst_41 : f32 to vector<4x128xf32>
    %85 = arith.select %78, %84, %83 : vector<4x128xi1>, vector<4x128xf32>
    %cst_42 = arith.constant 2.500000e-01 : f32
    %86 = vector.broadcast %cst_42 : f32 to vector<4x128xf32>
    %87 = arith.select %76, %86, %85 : vector<4x128xi1>, vector<4x128xf32>
    %88 = vector.broadcast %3 : vector<1x128xf32> to vector<4x128xf32>
    %89 = arith.mulf %87, %88 : vector<4x128xf32>
    %c0_i32_43 = arith.constant 0 : i32
    %90 = vector.broadcast %c0_i32_43 : i32 to vector<4x128xi32>
    %91 = arith.cmpi eq, %74, %90 : vector<4x128xi32>
    %c1_i32_44 = arith.constant 1 : i32
    %92 = vector.broadcast %c1_i32_44 : i32 to vector<4x128xi32>
    %93 = arith.cmpi eq, %74, %92 : vector<4x128xi32>
    %c2_i32_45 = arith.constant 2 : i32
    %94 = vector.broadcast %c2_i32_45 : i32 to vector<4x128xi32>
    %95 = arith.cmpi eq, %74, %94 : vector<4x128xi32>
    %cst_46 = arith.constant 3.125000e+00 : f32
    %cst_47 = arith.constant -3.125000e+00 : f32
    %96 = vector.broadcast %cst_46 : f32 to vector<4x128xf32>
    %97 = vector.broadcast %cst_47 : f32 to vector<4x128xf32>
    %98 = arith.select %95, %96, %97 : vector<4x128xi1>, vector<4x128xf32>
    %cst_48 = arith.constant 3.125000e+00 : f32
    %99 = vector.broadcast %cst_48 : f32 to vector<4x128xf32>
    %100 = arith.select %93, %99, %98 : vector<4x128xi1>, vector<4x128xf32>
    %cst_49 = arith.constant -3.125000e+00 : f32
    %101 = vector.broadcast %cst_49 : f32 to vector<4x128xf32>
    %102 = arith.select %91, %101, %100 : vector<4x128xi1>, vector<4x128xf32>
    %103 = vector.broadcast %71 : vector<1x128xf32> to vector<4x128xf32>
    %104 = arith.mulf %102, %103 : vector<4x128xf32>
    %105 = arith.addf %89, %104 : vector<4x128xf32>
    %c0_i32_50 = arith.constant 0 : i32
    %106 = vector.broadcast %c0_i32_50 : i32 to vector<4x128xi32>
    %107 = arith.cmpi eq, %74, %106 : vector<4x128xi32>
    %c1_i32_51 = arith.constant 1 : i32
    %108 = vector.broadcast %c1_i32_51 : i32 to vector<4x128xi32>
    %109 = arith.cmpi eq, %74, %108 : vector<4x128xi32>
    %c2_i32_52 = arith.constant 2 : i32
    %110 = vector.broadcast %c2_i32_52 : i32 to vector<4x128xi32>
    %111 = arith.cmpi eq, %74, %110 : vector<4x128xi32>
    %cst_53 = arith.constant 3.125000e+00 : f32
    %cst_54 = arith.constant -3.125000e+00 : f32
    %112 = vector.broadcast %cst_53 : f32 to vector<4x128xf32>
    %113 = vector.broadcast %cst_54 : f32 to vector<4x128xf32>
    %114 = arith.select %111, %112, %113 : vector<4x128xi1>, vector<4x128xf32>
    %cst_55 = arith.constant -3.125000e+00 : f32
    %115 = vector.broadcast %cst_55 : f32 to vector<4x128xf32>
    %116 = arith.select %109, %115, %114 : vector<4x128xi1>, vector<4x128xf32>
    %cst_56 = arith.constant 3.125000e+00 : f32
    %117 = vector.broadcast %cst_56 : f32 to vector<4x128xf32>
    %118 = arith.select %107, %117, %116 : vector<4x128xi1>, vector<4x128xf32>
    %119 = vector.broadcast %72 : vector<1x128xf32> to vector<4x128xf32>
    %120 = arith.mulf %118, %119 : vector<4x128xf32>
    %121 = arith.addf %105, %120 : vector<4x128xf32>
    %c0_i32_57 = arith.constant 0 : i32
    %122 = vector.broadcast %c0_i32_57 : i32 to vector<4x128xi32>
    %123 = arith.cmpi eq, %74, %122 : vector<4x128xi32>
    %c1_i32_58 = arith.constant 1 : i32
    %124 = vector.broadcast %c1_i32_58 : i32 to vector<4x128xi32>
    %125 = arith.cmpi eq, %74, %124 : vector<4x128xi32>
    %c2_i32_59 = arith.constant 2 : i32
    %126 = vector.broadcast %c2_i32_59 : i32 to vector<4x128xi32>
    %127 = arith.cmpi eq, %74, %126 : vector<4x128xi32>
    %cst_60 = arith.constant -19.2307701 : f32
    %cst_61 = arith.constant -19.2307701 : f32
    %128 = vector.broadcast %cst_60 : f32 to vector<4x128xf32>
    %129 = vector.broadcast %cst_61 : f32 to vector<4x128xf32>
    %130 = arith.select %127, %128, %129 : vector<4x128xi1>, vector<4x128xf32>
    %cst_62 = arith.constant 19.2307701 : f32
    %131 = vector.broadcast %cst_62 : f32 to vector<4x128xf32>
    %132 = arith.select %125, %131, %130 : vector<4x128xi1>, vector<4x128xf32>
    %cst_63 = arith.constant 19.2307701 : f32
    %133 = vector.broadcast %cst_63 : f32 to vector<4x128xf32>
    %134 = arith.select %123, %133, %132 : vector<4x128xi1>, vector<4x128xf32>
    %135 = vector.broadcast %73 : vector<1x128xf32> to vector<4x128xf32>
    %136 = arith.mulf %134, %135 : vector<4x128xf32>
    %137 = arith.addf %121, %136 : vector<4x128xf32>
    %cst_64 = arith.constant 0.000000e+00 : f32
    %138 = vector.broadcast %cst_64 : f32 to vector<4x128xf32>
    %139 = arith.maximumf %137, %138 : vector<4x128xf32>
    %140 = math.sqrt %139 : vector<4x128xf32>
    %cst_65 = arith.constant 1.000000e+01 : f32
    %141 = vector.broadcast %cst_65 : f32 to vector<4x128xf32>
    %142 = arith.mulf %140, %141 : vector<4x128xf32>
    %c0_66 = arith.constant 0 : index
    %c0_67 = arith.constant 0 : index
    %143 = vector.load %arg4[%c0_66, %c0_67] : memref<4x128xf32, #tpu.memory_space<vmem>>, vector<4x128xf32>
    tpu.vector_store %arg4[%c0_66, %c0_67], %142 {strides = array<i32>} : memref<4x128xf32, #tpu.memory_space<vmem>>, vector<4x128xf32>,
    return
  }
  func.func @transform_0(%arg0: i32) -> (i32, i32) {
    %c0_i32 = arith.constant 0 : i32
    %c0_i32_0 = arith.constant 0 : i32
    return %c0_i32, %arg0 : i32, i32
  }
  func.func @transform_1(%arg0: i32) -> (i32, i32) {
    %c0_i32 = arith.constant 0 : i32
    %c0_i32_0 = arith.constant 0 : i32
    return %c0_i32, %arg0 : i32, i32
  }
  func.func @transform_2(%arg0: i32) -> (i32, i32) {
    %c0_i32 = arith.constant 0 : i32
    %c0_i32_0 = arith.constant 0 : i32
    return %c0_i32, %arg0 : i32, i32
  }
  func.func @transform_3(%arg0: i32) -> (i32, i32) {
    %c0_i32 = arith.constant 0 : i32
    %c0_i32_0 = arith.constant 0 : i32
    return %c0_i32, %arg0 : i32, i32
  }
  func.func @transform_4(%arg0: i32) -> (i32, i32) {
    %c0_i32 = arith.constant 0 : i32
    %c0_i32_0 = arith.constant 0 : i32
    return %c0_i32, %arg0 : i32, i32
  }
}

</mosaic_0001>

<llo_original>
// kernel: step.1
$region0: #{step.1}
  #allocation0 [shape = 'u32[]', space=smem, size = 0x4, offset = 0x4, fixed_abs, tag = 'smem constant byte address 0x4 - core index']
  #allocation1 [shape = 'u32[72,128]{1,0:T(1,128)}', space=vmem, size = 0x9000, scoped, tag = 'internal scratch']
  %s0 = inlined_call_operand.vmem [shape: f32[4,128], index: 0, kind: input, shape index: {}]
  %s1 = inlined_call_operand.vmem [shape: f32[3,128], index: 1, kind: input, shape index: {}]
  %s2 = inlined_call_operand.vmem [shape: f32[3,384], index: 2, kind: input, shape index: {}, may-alias: {2,4}]
  %s3 = inlined_call_operand.hbm [shape: f32[4,128], index: 3, kind: output, shape index: {0}]
  %s4 = inlined_call_operand.vmem [shape: f32[3,384], index: 4, kind: output, shape index: {1}, may-alias: {2,4}]
  %5 = xla_tuple %s3, %s4
  %s6 = sld [smem:[#allocation0]]
  $region30: #{step.1} parent=0
    _
  %s8 = ssub.s32 1, %s6
  %s9 = scalar_select 0, %s8, %s6
  $region1: #{step.1} parent=0
    #allocation2 [shape = 'u8[2048]{0}', space=vmem, size = 0x800, scoped, tag = 'output window, operand 0, single buffered']
    #allocation3 [shape = 's32[1]{0}', space=sflag, size = 0x4, scoped, tag = 'scoped memory for step.1']
    %10 = vsyncpa [#allocation3], 0
    // Predicated region
    $region2: #{step.1} parent=1 // pred_check
      _
    $region3: #{step.1} parent=1 // pred_check_branch
      %12 = sbr.rel (0) target = $region5
    $region4: #{step.1} parent=1 // pred_region
      _
    $region5: #{step.1} parent=1 // pred_fallthru
      _
    // Predicated region
    $region6: #{step.1} parent=1 // pred_check
      _
    $region7: #{step.1} parent=1 // pred_check_branch
      %14 = sbr.rel (0) target = $region9
    $region8: #{step.1} parent=1 // pred_region
      _
    $region9: #{step.1} parent=1 // pred_fallthru
      _
    // Predicated region
    $region10: #{step.1} parent=1 // pred_check
      _
    $region11: #{step.1} parent=1 // pred_check_branch
      %16 = sbr.rel (0) target = $region13
    $region12: #{step.1} parent=1 // pred_region
      _
    $region13: #{step.1} parent=1 // pred_fallthru
      _
    %v17 = vld [vmem:[%s0] sm:$0x7]
    %v18 = vld [vmem:[%s0 + $0x3] sm:$0x1]
    %v19 = vmax.f32 %v18, 0.0
    %v20 = vld [vmem:[%s1] sm:$0x7]
    %v21 = vld [vmem:[%s2] sm:$0x7]
    %v22 = vld [vmem:[%s2 + $0x4] sm:$0x7]
    %v23 = vld [vmem:[%s2 + $0x8] sm:$0x7]
    %v24 = vlaneseq
    %v25 = vshrl.u32 %v24, 7
    %v26 = vsub.f32 %v17, %v20
    %v27 = vadd.f32 %v26, %v22
    %v28 = vmul.f32 %v27, 0.01
    %v29 = vadd.f32 %v21, %v28
    %v30 = vmul.f32 %v23, 0.0
    %v31 = vsub.f32 %v26, %v22
    %v32 = vmul.f32 %v31, 50.0
    %v33 = vadd.f32 %v30, %v32
    %vm34 = vcmp.eq.s32.totalorder %v25, 0
    %vm35 = vcmp.eq.s32.totalorder %v25, 1
    %v36 = vsel %vm35, 0.08, 0.15
    %v37 = vsel %vm34, 0.08, %v36
    %v38 = vmul.f32 %v37, %v26
    %v39 = vsel %vm35, 0.03, 0.05
    %v40 = vsel %vm34, 0.03, %v39
    %v41 = vmul.f32 %v40, %v29
    %v42 = vadd.f32 %v38, %v41
    %v43 = vsel %vm35, 0.0008, 0.0
    %v44 = vsel %vm34, 0.0008, %v43
    %v45 = vmul.f32 %v44, %v33
    %v46 = vadd.f32 %v42, %v45
    %v47 = vmax.f32 %v46, -999.0
    %v48 = vmin.f32 %v47, 999.0
    %v49 = vsel %vm35, 0.6666667, 0.4
    %v50 = vsel %vm34, 0.6666667, %v49
    %v51 = vsub.f32 %v48, %v46
    %v52 = vmul.f32 %v50, %v51
    %v53 = vadd.f32 %v29, %v52
    %54 = vst [vmem:[%s4] sm:$0x7] %v53
    %55 = vst [vmem:[%s4 + $0x4] sm:$0x7] %v26
    %56 = vst [vmem:[%s4 + $0x8] sm:$0x7] %v33
    %v57 = vperm.slane %v19, 0
    %v58 = vmul.f32 %v57, 0.25
    %vm59 = vcmp.eq.s32.totalorder %v25, 2
    %v60 = vsel %vm59, 3.125, -3.125
    %v61 = vsel %vm35, 3.125, %v60
    %v62 = vsel %vm34, -3.125, %v61
    %v63 = vperm.slane %v48, 0
    %v64 = vmul.f32 %v62, %v63
    %v65 = vadd.f32 %v58, %v64
    %v66 = vsel %vm35, -3.125, %v60
    %v67 = vsel %vm34, 3.125, %v66
    %v68 = vperm.slane %v48, 1
    %v69 = vmul.f32 %v67, %v68
    %v70 = vadd.f32 %v65, %v69
    %v71 = vsel %vm35, 19.23077, -19.23077
    %v72 = vsel %vm34, 19.23077, %v71
    %v73 = vperm.slane %v48, 2
    %v74 = vmul.f32 %v72, %v73
    %v75 = vadd.f32 %v70, %v74
    %v76 = vmax.f32 %v75, 0.0
    %v77 = vrsqrt.pop %v76
    %v78 = vmul.f32 %v77, %v76
    %v79 = vmul.f32 %v78, %v77
    %v80 = vmul.f32 0.5, %v79
    %v81 = vsub.f32 1.5, %v80
    %v82 = vmul.f32 %v77, %v81
    %v83 = vmul.f32 %v76, %v82
    %vm84 = vcmp.eq.f32.partialorder %v76, inf
    %v85 = vsel %vm84, %v76, %v83
    %vm86 = vcmp.eq.f32.partialorder %v76, 0.0
    %v87 = vand.u32 %v76, 2147483648
    %v88 = vsel %vm86, %v87, %v85
    %v89 = vmul.f32 %v88, 10.0
    %90 = vst [vmem:[#allocation2] sm:$0xf] %v89
    // Predicated region
    $region14: #{step.1} parent=1 // pred_check
      _
    $region15: #{step.1} parent=1 // pred_check_branch
      %92 = sbr.rel (0) target = $region17
    $region16: #{step.1} parent=1 // pred_region
      %94 = vsyncadd [#allocation3], 0
      %s96 = sshll.u32 [#allocation2], 4
      %s97 = int_to_ptr.vmem [resolvable:$true] %s96
      %s98 = sshll.u32 %s3, 4
      %s99 = int_to_ptr.hbm [resolvable:$true] %s98
      %101 = dma.vmem_to_hbm [thread:$0]  %s97, 64, %s99, [#allocation3]
    $region17: #{step.1} parent=1 // pred_fallthru
      _
    // Predicated region
    $region18: #{step.1} parent=1 // pred_check
      _
    $region19: #{step.1} parent=1 // pred_check_branch
      %103 = sbr.rel (0) target = $region21
    $region20: #{step.1} parent=1 // pred_region
      _
    $region21: #{step.1} parent=1 // pred_fallthru
      _
    // Predicated region
    $region22: #{step.1} parent=1 // pred_check
      _
    $region23: #{step.1} parent=1 // pred_check_branch
      %105 = sbr.rel (0) target = $region25
    $region24: #{step.1} parent=1 // pred_region
      %107 = dma.done [#allocation3], 64
    $region25: #{step.1} parent=1 // pred_fallthru
      _
    // Predicated region
    $region26: #{step.1} parent=1 // pred_check
      _
    $region27: #{step.1} parent=1 // pred_check_branch
      %109 = sbr.rel (0) target = $region29
    $region28: #{step.1} parent=1 // pred_region
      _
    $region29: #{step.1} parent=1 // pred_fallthru
      _
    %110 = vsyncpa [#allocation3], 1

</llo_original>
